<compile_context>
chip_gen: v6e
topology: v6e:2x2x1
jax: 0.10.0
libtpu: 0.0.40
codegen_flags: <defaults>
</compile_context>

<pallas_src>
import functools

import jax
import jax.numpy as jnp
import numpy as np
from jax import lax
from jax.experimental import pallas as pl
from jax.experimental.pallas import tpu as pltpu

_TARGET_POS_PER_BLOCK = 32768  # ~1.4 MiB of operand data per grid step (44 B/pos)


# ----------------------------------------------------------------------------
# Kernel: per-block partial sums for balanced BCE + masked IoU(-log) loss
# ----------------------------------------------------------------------------
def _ocean_loss_kernel(cls_ref, lbl_ref, wgt_ref, bb_ref, rt_ref, out_ref,
                       *, total_b, tile_b):
    """One grid step (tile_b batches, all HW positions).

    cls_ref, lbl_ref, wgt_ref : (tile_b, HW)    f32 VMEM
    bb_ref, rt_ref            : (tile_b, 4, HW) f32 VMEM   (l, t, r, b planes)
    out_ref                   : (1, 8, 128)     f32 VMEM   rows 0..5 = partial
                                sums broadcast across lanes, rows 6..7 = 0.
    """
    x = cls_ref[...]
    z = lbl_ref[...]
    w = wgt_ref[...]

    pos_b = (z == 1.0)
    neg_b = (z == 0.0)
    m_b = (w > 0.0)

    ragged = (total_b % tile_b) != 0
    if ragged:
        # The last batch block reads past the real batch; those rows hold stale
        # VMEM garbage — exclude them from every selection and sanitize x/z so
        # no NaN can be produced on the excluded rows.
        rem = total_b - pl.program_id(0) * tile_b
        valid = lax.broadcasted_iota(jnp.int32, x.shape, 0) < rem
        pos_b = jnp.logical_and(pos_b, valid)
        neg_b = jnp.logical_and(neg_b, valid)
        m_b = jnp.logical_and(m_b, valid)
        x = jnp.where(valid, x, 0.0)
        z = jnp.where(valid, z, 0.0)

    # ---- balanced BCE with logits (PyTorch BCEWithLogitsLoss math) ----------
    bce = jnp.maximum(x, 0.0) - x * z + jnp.log1p(jnp.exp(-jnp.abs(x)))
    s_bce_pos = jnp.sum(jnp.where(pos_b, bce, 0.0))
    s_pos = jnp.sum(pos_b.astype(jnp.float32))
    s_bce_neg = jnp.sum(jnp.where(neg_b, bce, 0.0))
    s_neg = jnp.sum(neg_b.astype(jnp.float32))

    # ---- IoU(-log) loss over positions with reg_weight > 0 ------------------
    bb = bb_ref[...]
    rt = rt_ref[...]
    p_l, p_t, p_r, p_b = bb[:, 0, :], bb[:, 1, :], bb[:, 2, :], bb[:, 3, :]
    t_l, t_t, t_r, t_b = rt[:, 0, :], rt[:, 1, :], rt[:, 2, :], rt[:, 3, :]

    target_area = (t_l + t_r) * (t_t + t_b)
    pred_area = (p_l + p_r) * (p_t + p_b)
    w_int = jnp.minimum(p_l, t_l) + jnp.minimum(p_r, t_r)
    h_int = jnp.minimum(p_b, t_b) + jnp.minimum(p_t, t_t)
    a_int = w_int * h_int
    a_uni = target_area + pred_area - a_int
    ratio = (a_int + 1.0) / (a_uni + 1.0)
    # Only selected positions ever reach the log (matches torch index_select;
    # also keeps garbage / non-positive ratios from poisoning the sum).
    iou_loss = -jnp.log(jnp.where(m_b, ratio, 1.0))
    s_iou = jnp.sum(iou_loss)
    s_m = jnp.sum(m_b.astype(jnp.float32))

    parts = (s_bce_pos, s_pos, s_bce_neg, s_neg, s_iou, s_m)
    rows = [jnp.full((1, 128), p, dtype=jnp.float32) for p in parts]
    rows.append(jnp.zeros((2, 128), dtype=jnp.float32))
    out_ref[0] = jnp.concatenate(rows, axis=0)


# ----------------------------------------------------------------------------
# Wrapper
# ----------------------------------------------------------------------------
@jax.jit
def ocean_forward(cls_pred, label, bbox_pred, reg_target, reg_weight):
    """Ocean_.forward (align_head=None branch): returns (cls_loss, None, reg_loss).

    cls_pred:   (B, 1, H, W) f32  — classification logits (NCHW)
    label:      (B, H, W)    f32  — {0, 1} classification labels
    bbox_pred:  (B, 4, H, W) f32  — predicted l/t/r/b distances (NCHW)
    reg_target: (B, H, W, 4) f32  — target l/t/r/b distances
    reg_weight: (B, H, W)    f32  — positive-sample mask (>0 means positive)
    """
    B, _, H, W = bbox_pred.shape
    HW = H * W

    # Free (view) reshapes — no HBM materialization.
    cls2 = cls_pred.reshape(B, HW).astype(jnp.float32)
    lbl2 = label.reshape(B, HW).astype(jnp.float32)
    wgt2 = reg_weight.reshape(B, HW).astype(jnp.float32)
    bb3 = bbox_pred.reshape(B, 4, HW).astype(jnp.float32)
    # The single unavoidable layout transform: move the trailing l/t/r/b axis
    # off the lane dimension so per-side planes are lane-contiguous.
    rt3 = jnp.moveaxis(reg_target, -1, 1).reshape(B, 4, HW).astype(jnp.float32)

    # ---- batch tiling: bounded VMEM, DMA/compute overlap, v7x dual-TC -------
    tb = max(1, min(B, _TARGET_POS_PER_BLOCK // max(HW, 1)))
    if B >= 16:
        tb = min(tb, -(-B // 2))          # ensure >=2 grid steps for megacore
    if tb != B:
        tb = max(8, (tb // 8) * 8)        # (tb, HW) blocks: sublane-dim rule
        if tb >= B:
            tb = B
    nb = -(-B // tb)                      # number of grid steps / batch blocks

    kernel = functools.partial(_ocean_loss_kernel, total_b=B, tile_b=tb)

    partials = pl.pallas_call(
        kernel,
        out_shape=jax.ShapeDtypeStruct((nb, 8, 128), jnp.float32),
        grid=(nb,),
        in_specs=[
            pl.BlockSpec((tb, HW), lambda i: (i, 0)),        # cls logits
            pl.BlockSpec((tb, HW), lambda i: (i, 0)),        # labels
            pl.BlockSpec((tb, HW), lambda i: (i, 0)),        # reg_weight
            pl.BlockSpec((tb, 4, HW), lambda i: (i, 0, 0)),  # bbox_pred planes
            pl.BlockSpec((tb, 4, HW), lambda i: (i, 0, 0)),  # reg_target planes
        ],
        out_specs=pl.BlockSpec((1, 8, 128), lambda i: (i, 0, 0)),
        compiler_params=pltpu.CompilerParams(
            dimension_semantics=("parallel",),
            vmem_limit_bytes=32 * 1024 * 1024,
        ),
    )(cls2, lbl2, wgt2, bb3, rt3)

    # Tiny cross-block combine + final divides (two-stage summation).
    s = jnp.sum(partials[:, :, 0], axis=0)           # (8,)
    cls_loss = 0.5 * (s[0] / s[1]) + 0.5 * (s[2] / s[3])
    reg_loss = s[4] / s[5]
    # NOTE: like the PyTorch reference, this NaNs if there are no positive /
    # negative labels or no reg_weight>0 positions.
    return cls_loss, None, reg_loss


# ----------------------------------------------------------------------------
# Reference (pure numpy) for a correctness check
# ----------------------------------------------------------------------------
def _ref_forward(cls_pred, label, bbox_pred, reg_target, reg_weight):
    x = np.asarray(cls_pred).reshape(-1).astype(np.float64)
    z = np.asarray(label).reshape(-1).astype(np.float64)
    bce = np.maximum(x, 0.0) - x * z + np.log1p(np.exp(-np.abs(x)))
    cls_loss = 0.5 * bce[z == 1].mean() + 0.5 * bce[z == 0].mean()

    bp = np.transpose(np.asarray(bbox_pred), (0, 2, 3, 1)).reshape(-1, 4).astype(np.float64)
    rt = np.asarray(reg_target).reshape(-1, 4).astype(np.float64)
    rw = np.asarray(reg_weight).reshape(-1)
    sel = rw > 0
    bp, rt = bp[sel], rt[sel]
    t_area = (rt[:, 0] + rt[:, 2]) * (rt[:, 1] + rt[:, 3])
    p_area = (bp[:, 0] + bp[:, 2]) * (bp[:, 1] + bp[:, 3])
    w_int = np.minimum(bp[:, 0], rt[:, 0]) + np.minimum(bp[:, 2], rt[:, 2])
    h_int = np.minimum(bp[:, 3], rt[:, 3]) + np.minimum(bp[:, 1], rt[:, 1])
    a_int = w_int * h_int
    a_uni = t_area + p_area - a_int
    reg_loss = (-np.log((a_int + 1.0) / (a_uni + 1.0))).mean()
    return cls_loss, reg_loss


def _make_inputs(key, B, H, W):
    k1, k2, k3, k4, k5 = jax.random.split(key, 5)
    cls_pred = jax.random.normal(k1, (B, 1, H, W), dtype=jnp.float32)
    label = (jax.random.uniform(k2, (B, H, W)) > 0.5).astype(jnp.float32)
    bbox_pred = jnp.abs(jax.random.normal(k3, (B, 4, H, W), dtype=jnp.float32)) * 10.0 + 1.0
    reg_target = jnp.abs(jax.random.normal(k4, (B, H, W, 4), dtype=jnp.float32)) * 10.0 + 1.0
    reg_weight = (jax.random.uniform(k5, (B, H, W)) > 0.7).astype(jnp.float32)
    # guarantee at least one positive / negative label and one positive weight
    label = label.at[0, 0, 0].set(1.0).at[0, 0, 1].set(0.0)
    reg_weight = reg_weight.at[0, 0, 0].set(1.0)
    return cls_pred, label, bbox_pred, reg_target, reg_weight


def _check(key, B, H, W):
    inputs = _make_inputs(key, B, H, W)
    cls_loss, _, reg_loss = ocean_forward(*inputs)
    cls_loss = jax.block_until_ready(cls_loss)
    reg_loss = jax.block_until_ready(reg_loss)
    ref_cls, ref_reg = _ref_forward(*inputs)
    assert np.isfinite(float(cls_loss)) and np.isfinite(float(reg_loss))
    np.testing.assert_allclose(float(cls_loss), ref_cls, rtol=1e-4, atol=1e-5)
    np.testing.assert_allclose(float(reg_loss), ref_reg, rtol=1e-4, atol=1e-5)


# ----------------------------------------------------------------------------
if __name__ == "__main__":
    key = jax.random.PRNGKey(0)
    k_a, k_b = jax.random.split(key)

    # Small stand-in for (batch, score_size, score_size): single grid step.
    _check(k_a, B=2, H=16, W=16)
    # Multi-block + ragged batch tail: exercises the grid, the "parallel"
    # batch sharding path and the in-kernel batch-validity masking.
    _check(k_b, B=18, H=5, W=5)

    print("KERNEL_OK")
</pallas_src>

<mosaic_0001>
module attributes {stable_mosaic.version = 11 : i64} {
  func.func @_ocean_loss_kernel(%arg0: i32, %arg1: memref<2x256xf32, #tpu.memory_space<vmem>>, %arg2: memref<2x256xf32, #tpu.memory_space<vmem>>, %arg3: memref<2x256xf32, #tpu.memory_space<vmem>>, %arg4: memref<2x4x256xf32, #tpu.memory_space<vmem>>, %arg5: memref<2x4x256xf32, #tpu.memory_space<vmem>>, %arg6: memref<1x8x128xf32, #tpu.memory_space<vmem>>) attributes {dimension_semantics = [#tpu.dimension_semantics<parallel>], iteration_bounds = array<i64: 1>, scalar_prefetch = 0 : i64, scratch_operands = 0 : i64, tpu.core_type = #tpu.core_type<tc>, window_params = [{transform_indices = @transform_0, window_bounds = array<i64: 2, 256>}, {transform_indices = @transform_1, window_bounds = array<i64: 2, 256>}, {transform_indices = @transform_2, window_bounds = array<i64: 2, 256>}, {transform_indices = @transform_3, window_bounds = array<i64: 2, 4, 256>}, {transform_indices = @transform_4, window_bounds = array<i64: 2, 4, 256>}, {transform_indices = @transform_5, window_bounds = array<i64: 1, 8, 128>}]} {
    %c0 = arith.constant 0 : index
    %c0_0 = arith.constant 0 : index
    %0 = vector.load %arg1[%c0, %c0_0] : memref<2x256xf32, #tpu.memory_space<vmem>>, vector<2x256xf32>
    %c0_1 = arith.constant 0 : index
    %c0_2 = arith.constant 0 : index
    %1 = vector.load %arg2[%c0_1, %c0_2] : memref<2x256xf32, #tpu.memory_space<vmem>>, vector<2x256xf32>
    %c0_3 = arith.constant 0 : index
    %c0_4 = arith.constant 0 : index
    %2 = vector.load %arg3[%c0_3, %c0_4] : memref<2x256xf32, #tpu.memory_space<vmem>>, vector<2x256xf32>
    %cst = arith.constant 1.000000e+00 : f32
    %3 = vector.broadcast %cst : f32 to vector<2x256xf32>
    %4 = arith.cmpf oeq, %1, %3 : vector<2x256xf32>
    %cst_5 = arith.constant 0.000000e+00 : f32
    %5 = vector.broadcast %cst_5 : f32 to vector<2x256xf32>
    %6 = arith.cmpf oeq, %1, %5 : vector<2x256xf32>
    %cst_6 = arith.constant 0.000000e+00 : f32
    %7 = vector.broadcast %cst_6 : f32 to vector<2x256xf32>
    %8 = arith.cmpf ogt, %2, %7 : vector<2x256xf32>
    %cst_7 = arith.constant 0.000000e+00 : f32
    %9 = vector.broadcast %cst_7 : f32 to vector<2x256xf32>
    %10 = arith.maximumf %0, %9 : vector<2x256xf32>
    %11 = arith.mulf %0, %1 : vector<2x256xf32>
    %12 = arith.subf %10, %11 : vector<2x256xf32>
    %13 = math.absf %0 : vector<2x256xf32>
    %cst_8 = arith.constant 0.000000e+00 : f32
    %14 = vector.broadcast %cst_8 : f32 to vector<2x256xf32>
    %15 = arith.subf %14, %13 : vector<2x256xf32>
    %16 = math.exp %15 : vector<2x256xf32>
    %17 = math.log1p %16 : vector<2x256xf32>
    %18 = arith.addf %12, %17 : vector<2x256xf32>
    %cst_9 = arith.constant 0.000000e+00 : f32
    %19 = vector.broadcast %cst_9 : f32 to vector<2x256xf32>
    %20 = arith.select %4, %18, %19 : vector<2x256xi1>, vector<2x256xf32>
    %21 = vector.shape_cast %20 : vector<2x256xf32> to vector<1x2x256xf32>
    %cst_10 = arith.constant dense<0.000000e+00> : vector<1xf32>
    %22 = vector.multi_reduction <add>, %21, %cst_10 [1, 2] : vector<1x2x256xf32> to vector<1xf32>
    %23 = vector.shape_cast %22 : vector<1xf32> to vector<1x1x1xf32>
    %24 = vector.extract %23[0, 0, 0] : f32 from vector<1x1x1xf32>
    %25 = arith.extui %4 : vector<2x256xi1> to vector<2x256xi32>
    %26 = arith.sitofp %25 : vector<2x256xi32> to vector<2x256xf32>
    %27 = vector.shape_cast %26 : vector<2x256xf32> to vector<1x2x256xf32>
    %cst_11 = arith.constant dense<0.000000e+00> : vector<1xf32>
    %28 = vector.multi_reduction <add>, %27, %cst_11 [1, 2] : vector<1x2x256xf32> to vector<1xf32>
    %29 = vector.shape_cast %28 : vector<1xf32> to vector<1x1x1xf32>
    %30 = vector.extract %29[0, 0, 0] : f32 from vector<1x1x1xf32>
    %cst_12 = arith.constant 0.000000e+00 : f32
    %31 = vector.broadcast %cst_12 : f32 to vector<2x256xf32>
    %32 = arith.select %6, %18, %31 : vector<2x256xi1>, vector<2x256xf32>
    %33 = vector.shape_cast %32 : vector<2x256xf32> to vector<1x2x256xf32>
    %cst_13 = arith.constant dense<0.000000e+00> : vector<1xf32>
    %34 = vector.multi_reduction <add>, %33, %cst_13 [1, 2] : vector<1x2x256xf32> to vector<1xf32>
    %35 = vector.shape_cast %34 : vector<1xf32> to vector<1x1x1xf32>
    %36 = vector.extract %35[0, 0, 0] : f32 from vector<1x1x1xf32>
    %37 = arith.extui %6 : vector<2x256xi1> to vector<2x256xi32>
    %38 = arith.sitofp %37 : vector<2x256xi32> to vector<2x256xf32>
    %39 = vector.shape_cast %38 : vector<2x256xf32> to vector<1x2x256xf32>
    %cst_14 = arith.constant dense<0.000000e+00> : vector<1xf32>
    %40 = vector.multi_reduction <add>, %39, %cst_14 [1, 2] : vector<1x2x256xf32> to vector<1xf32>
    %41 = vector.shape_cast %40 : vector<1xf32> to vector<1x1x1xf32>
    %42 = vector.extract %41[0, 0, 0] : f32 from vector<1x1x1xf32>
    %c0_15 = arith.constant 0 : index
    %c0_16 = arith.constant 0 : index
    %c0_17 = arith.constant 0 : index
    %43 = vector.load %arg4[%c0_15, %c0_16, %c0_17] : memref<2x4x256xf32, #tpu.memory_space<vmem>>, vector<2x4x256xf32>
    %c0_18 = arith.constant 0 : index
    %c0_19 = arith.constant 0 : index
    %c0_20 = arith.constant 0 : index
    %44 = vector.load %arg5[%c0_18, %c0_19, %c0_20] : memref<2x4x256xf32, #tpu.memory_space<vmem>>, vector<2x4x256xf32>
    %45 = vector.extract_strided_slice %43 {offsets = [0, 0, 0], sizes = [2, 1, 256], strides = [1, 1, 1]} : vector<2x4x256xf32> to vector<2x1x256xf32>
    %46 = vector.shape_cast %45 : vector<2x1x256xf32> to vector<2x256xf32>
    %47 = vector.extract_strided_slice %43 {offsets = [0, 1, 0], sizes = [2, 1, 256], strides = [1, 1, 1]} : vector<2x4x256xf32> to vector<2x1x256xf32>
    %48 = vector.shape_cast %47 : vector<2x1x256xf32> to vector<2x256xf32>
    %49 = vector.extract_strided_slice %43 {offsets = [0, 2, 0], sizes = [2, 1, 256], strides = [1, 1, 1]} : vector<2x4x256xf32> to vector<2x1x256xf32>
    %50 = vector.shape_cast %49 : vector<2x1x256xf32> to vector<2x256xf32>
    %51 = vector.extract_strided_slice %43 {offsets = [0, 3, 0], sizes = [2, 1, 256], strides = [1, 1, 1]} : vector<2x4x256xf32> to vector<2x1x256xf32>
    %52 = vector.shape_cast %51 : vector<2x1x256xf32> to vector<2x256xf32>
    %53 = vector.extract_strided_slice %44 {offsets = [0, 0, 0], sizes = [2, 1, 256], strides = [1, 1, 1]} : vector<2x4x256xf32> to vector<2x1x256xf32>
    %54 = vector.shape_cast %53 : vector<2x1x256xf32> to vector<2x256xf32>
    %55 = vector.extract_strided_slice %44 {offsets = [0, 1, 0], sizes = [2, 1, 256], strides = [1, 1, 1]} : vector<2x4x256xf32> to vector<2x1x256xf32>
    %56 = vector.shape_cast %55 : vector<2x1x256xf32> to vector<2x256xf32>
    %57 = vector.extract_strided_slice %44 {offsets = [0, 2, 0], sizes = [2, 1, 256], strides = [1, 1, 1]} : vector<2x4x256xf32> to vector<2x1x256xf32>
    %58 = vector.shape_cast %57 : vector<2x1x256xf32> to vector<2x256xf32>
    %59 = vector.extract_strided_slice %44 {offsets = [0, 3, 0], sizes = [2, 1, 256], strides = [1, 1, 1]} : vector<2x4x256xf32> to vector<2x1x256xf32>
    %60 = vector.shape_cast %59 : vector<2x1x256xf32> to vector<2x256xf32>
    %61 = arith.addf %54, %58 : vector<2x256xf32>
    %62 = arith.addf %56, %60 : vector<2x256xf32>
    %63 = arith.mulf %61, %62 : vector<2x256xf32>
    %64 = arith.addf %46, %50 : vector<2x256xf32>
    %65 = arith.addf %48, %52 : vector<2x256xf32>
    %66 = arith.mulf %64, %65 : vector<2x256xf32>
    %67 = arith.minimumf %46, %54 : vector<2x256xf32>
    %68 = arith.minimumf %50, %58 : vector<2x256xf32>
    %69 = arith.addf %67, %68 : vector<2x256xf32>
    %70 = arith.minimumf %52, %60 : vector<2x256xf32>
    %71 = arith.minimumf %48, %56 : vector<2x256xf32>
    %72 = arith.addf %70, %71 : vector<2x256xf32>
    %73 = arith.mulf %69, %72 : vector<2x256xf32>
    %74 = arith.addf %63, %66 : vector<2x256xf32>
    %75 = arith.subf %74, %73 : vector<2x256xf32>
    %cst_21 = arith.constant 1.000000e+00 : f32
    %76 = vector.broadcast %cst_21 : f32 to vector<2x256xf32>
    %77 = arith.addf %73, %76 : vector<2x256xf32>
    %cst_22 = arith.constant 1.000000e+00 : f32
    %78 = vector.broadcast %cst_22 : f32 to vector<2x256xf32>
    %79 = arith.addf %75, %78 : vector<2x256xf32>
    %80 = arith.divf %77, %79 : vector<2x256xf32>
    %cst_23 = arith.constant 1.000000e+00 : f32
    %81 = vector.broadcast %cst_23 : f32 to vector<2x256xf32>
    %82 = arith.select %8, %80, %81 : vector<2x256xi1>, vector<2x256xf32>
    %83 = math.log %82 : vector<2x256xf32>
    %cst_24 = arith.constant 0.000000e+00 : f32
    %84 = vector.broadcast %cst_24 : f32 to vector<2x256xf32>
    %85 = arith.subf %84, %83 : vector<2x256xf32>
    %86 = vector.shape_cast %85 : vector<2x256xf32> to vector<1x2x256xf32>
    %cst_25 = arith.constant dense<0.000000e+00> : vector<1xf32>
    %87 = vector.multi_reduction <add>, %86, %cst_25 [1, 2] : vector<1x2x256xf32> to vector<1xf32>
    %88 = vector.shape_cast %87 : vector<1xf32> to vector<1x1x1xf32>
    %89 = vector.extract %88[0, 0, 0] : f32 from vector<1x1x1xf32>
    %90 = arith.extui %8 : vector<2x256xi1> to vector<2x256xi32>
    %91 = arith.sitofp %90 : vector<2x256xi32> to vector<2x256xf32>
    %92 = vector.shape_cast %91 : vector<2x256xf32> to vector<1x2x256xf32>
    %cst_26 = arith.constant dense<0.000000e+00> : vector<1xf32>
    %93 = vector.multi_reduction <add>, %92, %cst_26 [1, 2] : vector<1x2x256xf32> to vector<1xf32>
    %94 = vector.shape_cast %93 : vector<1xf32> to vector<1x1x1xf32>
    %95 = vector.extract %94[0, 0, 0] : f32 from vector<1x1x1xf32>
    %96 = vector.broadcast %24 : f32 to vector<1x128xf32>
    %97 = vector.broadcast %30 : f32 to vector<1x128xf32>
    %98 = vector.broadcast %36 : f32 to vector<1x128xf32>
    %99 = vector.broadcast %42 : f32 to vector<1x128xf32>
    %100 = vector.broadcast %89 : f32 to vector<1x128xf32>
    %101 = vector.broadcast %95 : f32 to vector<1x128xf32>
    %cst_27 = arith.constant 0.000000e+00 : f32
    %102 = vector.broadcast %cst_27 : f32 to vector<2x128xf32>
    %103 = tpu.concatenate %96, %97, %98, %99, %100, %101, %102 in 0 : vector<1x128xf32>, vector<1x128xf32>, vector<1x128xf32>, vector<1x128xf32>, vector<1x128xf32>, vector<1x128xf32>, vector<2x128xf32> -> vector<8x128xf32>
    %c0_28 = arith.constant 0 : index
    %c0_29 = arith.constant 0 : index
    %c0_30 = arith.constant 0 : index
    %104 = vector.load %arg6[%c0_28, %c0_29, %c0_30] : memref<1x8x128xf32, #tpu.memory_space<vmem>>, vector<1x8x128xf32>
    %105 = vector.shape_cast %104 : vector<1x8x128xf32> to vector<8x128xf32>
    %106 = vector.shape_cast %103 : vector<8x128xf32> to vector<1x8x128xf32>
    tpu.vector_store %arg6[%c0_28, %c0_29, %c0_30], %106 {strides = array<i32>} : memref<1x8x128xf32, #tpu.memory_space<vmem>>, vector<1x8x128xf32>,
    return
  }
  func.func @transform_0(%arg0: i32) -> (i32, i32) {
    %c0_i32 = arith.constant 0 : i32
    %c0_i32_0 = arith.constant 0 : i32
    return %arg0, %c0_i32 : i32, i32
  }
  func.func @transform_1(%arg0: i32) -> (i32, i32) {
    %c0_i32 = arith.constant 0 : i32
    %c0_i32_0 = arith.constant 0 : i32
    return %arg0, %c0_i32 : i32, i32
  }
  func.func @transform_2(%arg0: i32) -> (i32, i32) {
    %c0_i32 = arith.constant 0 : i32
    %c0_i32_0 = arith.constant 0 : i32
    return %arg0, %c0_i32 : i32, i32
  }
  func.func @transform_3(%arg0: i32) -> (i32, i32, i32) {
    %c0_i32 = arith.constant 0 : i32
    %c0_i32_0 = arith.constant 0 : i32
    %c0_i32_1 = arith.constant 0 : i32
    return %arg0, %c0_i32, %c0_i32_0 : i32, i32, i32
  }
  func.func @transform_4(%arg0: i32) -> (i32, i32, i32) {
    %c0_i32 = arith.constant 0 : i32
    %c0_i32_0 = arith.constant 0 : i32
    %c0_i32_1 = arith.constant 0 : i32
    return %arg0, %c0_i32, %c0_i32_0 : i32, i32, i32
  }
  func.func @transform_5(%arg0: i32) -> (i32, i32, i32) {
    %c0_i32 = arith.constant 0 : i32
    %c0_i32_0 = arith.constant 0 : i32
    %c0_i32_1 = arith.constant 0 : i32
    return %arg0, %c0_i32, %c0_i32_0 : i32, i32, i32
  }
}

</mosaic_0001>

<llo_original>
// kernel: ocean_forward.1
$region0: #{ocean_forward.1}
  #allocation0 [shape = 'u32[]', space=smem, size = 0x4, offset = 0x4, fixed_abs, tag = 'smem constant byte address 0x4 - core index']
  #allocation1 [shape = 'u32[144,128]{1,0:T(1,128)}', space=vmem, size = 0x12000, scoped, tag = 'internal scratch']
  %s0 = inlined_call_operand.vmem [shape: f32[2,256], index: 0, kind: input, shape index: {}]
  %s1 = inlined_call_operand.vmem [shape: f32[2,256], index: 1, kind: input, shape index: {}]
  %s2 = inlined_call_operand.vmem [shape: f32[2,256], index: 2, kind: input, shape index: {}]
  %s3 = inlined_call_operand.vmem [shape: f32[2,4,256], index: 3, kind: input, shape index: {}]
  %s4 = inlined_call_operand.vmem [shape: f32[2,4,256], index: 4, kind: input, shape index: {}]
  %s5 = inlined_call_operand.vmem [shape: f32[1,8,128], index: 5, kind: output, shape index: {}]
  %s6 = sld [smem:[#allocation0]]
  $region30: #{ocean_forward.1} parent=0
    _
  %s8 = ssub.s32 1, %s6
  %s9 = scalar_select 0, %s8, %s6
  // Predicated region
  $region2: #{ocean_forward.1} parent=0 // pred_check
    _
  $region3: #{ocean_forward.1} parent=0 // pred_check_branch
    %11 = sbr.rel (0) target = $region5
  $region4: #{ocean_forward.1} parent=0 // pred_region
    _
  $region5: #{ocean_forward.1} parent=0 // pred_fallthru
    _
  // Predicated region
  $region6: #{ocean_forward.1} parent=0 // pred_check
    _
  $region7: #{ocean_forward.1} parent=0 // pred_check_branch
    %13 = sbr.rel (0) target = $region9
  $region8: #{ocean_forward.1} parent=0 // pred_region
    _
  $region9: #{ocean_forward.1} parent=0 // pred_fallthru
    _
  // Predicated region
  $region10: #{ocean_forward.1} parent=0 // pred_check
    _
  $region11: #{ocean_forward.1} parent=0 // pred_check_branch
    %15 = sbr.rel (0) target = $region13
  $region12: #{ocean_forward.1} parent=0 // pred_region
    _
  $region13: #{ocean_forward.1} parent=0 // pred_fallthru
    _
  // Predicated region
  $region14: #{ocean_forward.1} parent=0 // pred_check
    _
  $region15: #{ocean_forward.1} parent=0 // pred_check_branch
    %17 = sbr.rel (0) target = $region17
  $region16: #{ocean_forward.1} parent=0 // pred_region
    _
  $region17: #{ocean_forward.1} parent=0 // pred_fallthru
    _
  // Predicated region
  $region18: #{ocean_forward.1} parent=0 // pred_check
    _
  $region19: #{ocean_forward.1} parent=0 // pred_check_branch
    %19 = sbr.rel (0) target = $region21
  $region20: #{ocean_forward.1} parent=0 // pred_region
    _
  $region21: #{ocean_forward.1} parent=0 // pred_fallthru
    _
  %v20 = vld [vmem:[%s0] sm:$0xf]
  %v21 = vld [vmem:[%s1] sm:$0xf]
  %v22 = vld [vmem:[%s2] sm:$0xf]
  %vm23 = vcmp.eq.f32.partialorder %v21, 1.0
  %vm24 = vcmp.eq.f32.partialorder %v21, 0.0
  %vm25 = vcmp.gt.f32.partialorder %v22, 0.0
  %v26 = vmax.f32 %v20, 0.0
  %v27 = vmul.f32 %v20, %v21
  %v28 = vsub.f32 %v26, %v27
  %v29 = vand.u32 2147483647, %v20
  %v30 = vsub.f32 0.0, %v29
  %v31 = vmul.f32 %v30, 1.442695
  %v32 = vpow.pop %v31
  %v33 = vadd.f32 %v32, 1.0
  %v34 = vlog2.pop %v33
  %v35 = vmul.f32 %v34, 0.6931472
  %v36 = vmul.f32 -0.5, %v32
  %v37 = vadd.f32 %v36, 1.0
  %v38 = vmul.f32 %v37, %v32
  %v39 = vand.u32 2147483647, %v32
  %vm40 = vcmp.lt.f32.partialorder %v39, 0.0004427343
  %v41 = vsel %vm40, %v38, %v35
  %v42 = vadd.f32 %v28, %v41
  %v43 = vsel %vm23, %v42, 0.0
  %v46 = vunpack.c.l.s4 1983009808
  %v47 = vunpack.c.0.s8 %v46
  %v48 = vlaneseq
  %v49 = vshrl.u32 %v48, 7
  %v50 = vsub.s32 %v47, %v49
  %v51 = vrot.slane %v43, %v50
  %v52 = vcombine.high %v51, %v51
  %vm55 = vcmask 1041408
  %v56 = vsel %vm55, %v51, 0.0
  %v57 = vsel %vm55, %v52, 0.0
  %v58 = vadd.f32 %v56, %v57
  %59 = vadd.xlane.f32.xlu0 %v58
  %v60 = vpop.xlane.xlu0 %59
  %v61 = vrot.slane %v60, 4
  %v62 = vadd.f32 %v60, %v61
  %v63 = vrot.slane %v62, 2
  %v64 = vadd.f32 %v62, %v63
  %v65 = vrot.slane %v64, 1
  %v66 = vadd.f32 %v64, %v65
  %s67 = vtos %v66
  %v68 = vsel %vm23, 1, 0
  %v69 = vcvt.s32.f32 %v68
  %v72 = vunpack.c.l.s4 1983009808
  %v73 = vunpack.c.0.s8 %v72
  %v74 = vlaneseq
  %v75 = vshrl.u32 %v74, 7
  %v76 = vsub.s32 %v73, %v75
  %v77 = vrot.slane %v69, %v76
  %v78 = vcombine.high %v77, %v77
  %v81 = vsel %vm55, %v77, 0.0
  %v82 = vsel %vm55, %v78, 0.0
  %v83 = vadd.f32 %v81, %v82
  %84 = vadd.xlane.f32.xlu0 %v83
  %v85 = vpop.xlane.xlu0 %84
  %v86 = vrot.slane %v85, 4
  %v87 = vadd.f32 %v85, %v86
  %v88 = vrot.slane %v87, 2
  %v89 = vadd.f32 %v87, %v88
  %v90 = vrot.slane %v89, 1
  %v91 = vadd.f32 %v89, %v90
  %s92 = vtos %v91
  %v93 = vsel %vm24, %v42, 0.0
  %v96 = vunpack.c.l.s4 1983009808
  %v97 = vunpack.c.0.s8 %v96
  %v98 = vlaneseq
  %v99 = vshrl.u32 %v98, 7
  %v100 = vsub.s32 %v97, %v99
  %v101 = vrot.slane %v93, %v100
  %v102 = vcombine.high %v101, %v101
  %v105 = vsel %vm55, %v101, 0.0
  %v106 = vsel %vm55, %v102, 0.0
  %v107 = vadd.f32 %v105, %v106
  %108 = vadd.xlane.f32.xlu0 %v107
  %v109 = vpop.xlane.xlu0 %108
  %v110 = vrot.slane %v109, 4
  %v111 = vadd.f32 %v109, %v110
  %v112 = vrot.slane %v111, 2
  %v113 = vadd.f32 %v111, %v112
  %v114 = vrot.slane %v113, 1
  %v115 = vadd.f32 %v113, %v114
  %s116 = vtos %v115
  %v117 = vsel %vm24, 1, 0
  %v118 = vcvt.s32.f32 %v117
  %v121 = vunpack.c.l.s4 1983009808
  %v122 = vunpack.c.0.s8 %v121
  %v123 = vlaneseq
  %v124 = vshrl.u32 %v123, 7
  %v125 = vsub.s32 %v122, %v124
  %v126 = vrot.slane %v118, %v125
  %v127 = vcombine.high %v126, %v126
  %v130 = vsel %vm55, %v126, 0.0
  %v131 = vsel %vm55, %v127, 0.0
  %v132 = vadd.f32 %v130, %v131
  %133 = vadd.xlane.f32.xlu0 %v132
  %v134 = vpop.xlane.xlu0 %133
  %v135 = vrot.slane %v134, 4
  %v136 = vadd.f32 %v134, %v135
  %v137 = vrot.slane %v136, 2
  %v138 = vadd.f32 %v136, %v137
  %v139 = vrot.slane %v138, 1
  %v140 = vadd.f32 %v138, %v139
  %s141 = vtos %v140
  %v142 = vld [vmem:[%s3] sm:$0xff]
  %v143 = vld [vmem:[%s3 + $0x8] sm:$0xff]
  %v144 = vld [vmem:[%s4] sm:$0xff]
  %v145 = vld [vmem:[%s4 + $0x8] sm:$0xff]
  %v148 = vrot.slane %v144, 6
  %v149 = vrot.slane %v148, 4
  %v150 = vrot.slane %v145, 6
  %v151 = vrot.slane %v150, 4
  %v154 = vadd.f32 %v144, %v149
  %v155 = vadd.f32 %v145, %v151
  %v158 = vrot.slane %v154, 5
  %v159 = vrot.slane %v158, 4
  %v160 = vrot.slane %v155, 5
  %v161 = vrot.slane %v160, 4
  %v164 = vmul.f32 %v154, %v159
  %v165 = vmul.f32 %v155, %v161
  %v168 = vrot.slane %v142, 6
  %v169 = vrot.slane %v168, 4
  %v170 = vrot.slane %v143, 6
  %v171 = vrot.slane %v170, 4
  %v174 = vadd.f32 %v142, %v169
  %v175 = vadd.f32 %v143, %v171
  %v178 = vrot.slane %v174, 5
  %v179 = vrot.slane %v178, 4
  %v180 = vrot.slane %v175, 5
  %v181 = vrot.slane %v180, 4
  %v184 = vmul.f32 %v174, %v179
  %v185 = vmul.f32 %v175, %v181
  %v186 = vmin.f32 %v142, %v144
  %v187 = vmin.f32 %v143, %v145
  %v190 = vrot.slane %v186, 6
  %v191 = vrot.slane %v190, 4
  %v192 = vrot.slane %v187, 6
  %v193 = vrot.slane %v192, 4
  %v196 = vadd.f32 %v186, %v191
  %v197 = vadd.f32 %v187, %v193
  %v200 = vadd.f32 %v186, %v190
  %v201 = vadd.f32 %v187, %v192
  %v204 = vrot.slane %v200, 7
  %v205 = vrot.slane %v204, 4
  %v206 = vrot.slane %v201, 7
  %v207 = vrot.slane %v206, 4
  %v210 = vmul.f32 %v196, %v205
  %v211 = vmul.f32 %v197, %v207
  %v212 = vadd.f32 %v164, %v184
  %v213 = vadd.f32 %v165, %v185
  %v214 = vsub.f32 %v212, %v210
  %v215 = vsub.f32 %v213, %v211
  %v216 = vadd.f32 %v210, 1.0
  %v217 = vadd.f32 %v211, 1.0
  %v218 = vadd.f32 %v214, 1.0
  %v219 = vadd.f32 %v215, 1.0
  %v220 = vrcp.pop %v218
  %v221 = vmul.f32 %v216, %v220
  %v222 = vrcp.pop %v219
  %v223 = vmul.f32 %v217, %v222
  %v227 = vunpack.c.l.s4 1983009808
  %v228 = vunpack.c.0.s8 %v227
  %v229 = vlaneseq
  %v230 = vshrl.u32 %v229, 7
  %v231 = vsub.s32 %v228, %v230
  %v232 = vrot.slane %v221, %v231
  %v234 = vunpack.c.l.s4 1983009808
  %v235 = vunpack.c.0.s8 %v234
  %v236 = vlaneseq
  %v237 = vshrl.u32 %v236, 7
  %v238 = vsub.s32 %v235, %v237
  %v239 = vrot.slane %v223, %v238
  %vm240 = vcmask 1044484
  %v241 = vsel %vm240, %v232, %v232
  %vm242 = vcmask 1046534
  %v243 = vsel %vm242, %v232, %v241
  %v244 = vrot.slane %v239, 7
  %vm245 = vcmask 1041409
  %v246 = vsel %vm245, %v244, %v243
  %vm247 = vcmask 1043459
  %v248 = vsel %vm247, %v244, %v246
  %vm249 = vcmask 1045509
  %v250 = vsel %vm249, %v244, %v248
  %vm251 = vcmask 1047559
  %v252 = vsel %vm251, %v244, %v250
  %v254 = vsel %vm25, %v252, 1.0
  %v255 = vlog2.pop %v254
  %v256 = vmul.f32 %v255, 0.6931472
  %v257 = vsub.f32 0.0, %v256
  %v260 = vunpack.c.l.s4 1983009808
  %v261 = vunpack.c.0.s8 %v260
  %v262 = vlaneseq
  %v263 = vshrl.u32 %v262, 7
  %v264 = vsub.s32 %v261, %v263
  %v265 = vrot.slane %v257, %v264
  %v266 = vcombine.high %v265, %v265
  %v269 = vsel %vm55, %v265, 0.0
  %v270 = vsel %vm55, %v266, 0.0
  %v271 = vadd.f32 %v269, %v270
  %272 = vadd.xlane.f32.xlu0 %v271
  %v273 = vpop.xlane.xlu0 %272
  %v274 = vrot.slane %v273, 4
  %v275 = vadd.f32 %v273, %v274
  %v276 = vrot.slane %v275, 2
  %v277 = vadd.f32 %v275, %v276
  %v278 = vrot.slane %v277, 1
  %v279 = vadd.f32 %v277, %v278
  %s280 = vtos %v279
  %v281 = vsel %vm25, 1, 0
  %v282 = vcvt.s32.f32 %v281
  %v285 = vunpack.c.l.s4 1983009808
  %v286 = vunpack.c.0.s8 %v285
  %v287 = vlaneseq
  %v288 = vshrl.u32 %v287, 7
  %v289 = vsub.s32 %v286, %v288
  %v290 = vrot.slane %v282, %v289
  %v291 = vcombine.high %v290, %v290
  %v294 = vsel %vm55, %v290, 0.0
  %v295 = vsel %vm55, %v291, 0.0
  %v296 = vadd.f32 %v294, %v295
  %297 = vadd.xlane.f32.xlu0 %v296
  %v298 = vpop.xlane.xlu0 %297
  %v299 = vrot.slane %v298, 4
  %v300 = vadd.f32 %v298, %v299
  %v301 = vrot.slane %v300, 2
  %v302 = vadd.f32 %v300, %v301
  %v303 = vrot.slane %v302, 1
  %v304 = vadd.f32 %v302, %v303
  %s305 = vtos %v304
  %v306 = vstv %s67
  %v307 = vstv %s92
  %v308 = vstv %s116
  %v309 = vstv %s141
  %v310 = vstv %s280
  %v311 = vstv %s305
  %vm312 = vcmask 1040384
  %v313 = vsel %vm312, %v306, %v307
  %v314 = vsel %vm55, %v313, %v308
  %vm315 = vcmask 1042432
  %v316 = vsel %vm315, %v314, %v309
  %vm317 = vcmask 1043456
  %v318 = vsel %vm317, %v316, %v310
  %vm319 = vcmask 1044480
  %v320 = vsel %vm319, %v318, %v311
  %vm321 = vcmask 1045504
  %v322 = vsel %vm321, %v320, 0.0
  %323 = vst [vmem:[%s5] sm:$0xff] %v322
  // Predicated region
  $region22: #{ocean_forward.1} parent=0 // pred_check
    _
  $region23: #{ocean_forward.1} parent=0 // pred_check_branch
    %325 = sbr.rel (0) target = $region25
  $region24: #{ocean_forward.1} parent=0 // pred_region
    _
  $region25: #{ocean_forward.1} parent=0 // pred_fallthru
    _
  // Predicated region
  $region26: #{ocean_forward.1} parent=0 // pred_check
    _
  $region27: #{ocean_forward.1} parent=0 // pred_check_branch
    %327 = sbr.rel (0) target = $region29
  $region28: #{ocean_forward.1} parent=0 // pred_region
    _
  $region29: #{ocean_forward.1} parent=0 // pred_fallthru
    _

</llo_original>
